<compile_context>
chip_gen: v5e
topology: v5e:2x2
jax: 0.10.0
libtpu: 0.0.40
codegen_flags: <defaults>
</compile_context>

<pallas_src>
import jax
import jax.numpy as jnp
from jax.experimental import pallas as pl
from jax.experimental.pallas import tpu as pltpu


_EPS = 1e-8
_LANE = 128
_MIB = 1024 * 1024
_INV_SQRT2 = 0.7071067811865476


def _round_up(x, m):
    return ((x + m - 1) // m) * m


def _gelu_exact(v):
    # PyTorch F.gelu default: exact erf formulation.
    return 0.5 * v * (1.0 + jax.lax.erf(v * _INV_SQRT2))


def dishts_norm_kernel(x_ref, w0_ref, gamma_ref, beta_ref, o_ref):
    x = x_ref[...].astype(jnp.float32)           # (TB, L, N)
    w0 = w0_ref[...].astype(jnp.float32)         # (L, N)   phil projection
    gamma = gamma_ref[...].astype(jnp.float32)   # (1, N)
    beta = beta_ref[...].astype(jnp.float32)     # (1, N)

    L = x.shape[1]

    # theta_l[b, n] = sum_l x[b, l, n] * reduce_mlayer[n, l, 0]
    # (weight differs per series n -> not an MXU contraction; sublane reduce.)
    theta_l = jnp.sum(x * w0[None, :, :], axis=1, keepdims=True)   # (TB, 1, N)
    phil = _gelu_exact(theta_l)                                    # (TB, 1, N)

    # Centered input is reused for both the statistic and the epilogue.
    xc = x - phil                                                  # (TB, L, N)
    # Bias-corrected variance-style statistic around phil.
    xil = jnp.sum(xc * xc, axis=1, keepdims=True) * (1.0 / float(L - 1))

    # Folded epilogue: rsqrt on the small (TB,1,N) stats (EUP), one full-size
    # multiply-add instead of divide + mul + add.
    scale = gamma[None, :, :] * jax.lax.rsqrt(xil + _EPS)          # (TB, 1, N)
    o_ref[...] = (xc * scale + beta[None, :, :]).astype(o_ref.dtype)


def _choose_batch_tile(B, L, N, dtype):
    """Pick batch tile TB and a tight scoped-VMEM limit.

    Footprint of one (tb, L, N) block accounts for the (8,128) tiling of the
    two minor axes (sublane round-up doubles for 16-bit dtypes).
    """
    itemsize = jnp.dtype(dtype).itemsize
    sublane = 8 * max(1, 4 // itemsize)            # 8 (f32), 16 (bf16)
    row_io = _round_up(L, sublane) * _round_up(N, _LANE) * itemsize
    row_f32 = _round_up(L, 8) * _round_up(N, _LANE) * 4

    # ~2 MiB input tiles already sit near the HBM roofline; bigger tiles only
    # shrink the grid (worse overlap) and inflate scoped VMEM (bad on v7x).
    tile_cap_bytes = 2 * _MIB
    tb_cap = max(1, tile_cap_bytes // row_io)

    # Keep >= 8 grid steps for pipeline overlap and >= 2 so the "parallel"
    # batch axis can split across both v7x TensorCores.
    if B >= 8:
        tb_grid = max(1, B // 8)
    elif B >= 2:
        tb_grid = max(1, B // 2)
    else:
        tb_grid = 1
    tb = max(1, min(B, tb_cap, tb_grid))

    # Tight scoped-VMEM request: double-buffered in + out blocks, ~5 full-tile
    # f32 temporaries (x upcast, x*w0, xc, epilogue, relayout slack), resident
    # w0/gamma/beta, plus margin.  Floor at the 32 MiB default.
    w0_bytes = _round_up(L, 8) * _round_up(N, _LANE) * 4
    need = 4 * tb * row_io + 5 * tb * row_f32 + 2 * w0_bytes + 2 * _MIB
    vmem_limit = int(min(max(need, 32 * _MIB), 100 * _MIB))
    return tb, vmem_limit


def dishts_norm(batch_x, reduce_mlayer, gamma, beta):
    """DishTS forward (mode='norm').

    batch_x:        (B, L, N) float32 or bfloat16
    reduce_mlayer:  (N, L, 2) float32
    gamma, beta:    (N,) float32
    returns:        (B, L, N), same dtype as batch_x
    """
    B, L, N = batch_x.shape
    # Only the phil projection (channel 0) is live in 'norm' mode; the phih
    # projection (channel 1) is never DMA'd.
    w0 = jnp.transpose(reduce_mlayer[:, :, 0])      # (L, N), tiny
    gamma2 = gamma.reshape(1, N)
    beta2 = beta.reshape(1, N)

    tb, vmem_limit = _choose_batch_tile(B, L, N, batch_x.dtype)
    grid = (pl.cdiv(B, tb),)

    elems = B * L * N
    itemsize = jnp.dtype(batch_x.dtype).itemsize
    cost = pl.CostEstimate(
        flops=7 * elems,                      # mul+add (theta), sub, sq+add, fma
        transcendentals=2 * B * N,            # erf + rsqrt per (b, n)
        bytes_accessed=2 * elems * itemsize + (L * N + 2 * N) * 4,
    )

    return pl.pallas_call(
        dishts_norm_kernel,
        out_shape=jax.ShapeDtypeStruct((B, L, N), batch_x.dtype),
        grid=grid,
        in_specs=[
            pl.BlockSpec((tb, L, N), lambda i: (i, 0, 0)),   # x: tiled over B
            pl.BlockSpec((L, N), lambda i: (0, 0)),          # w0: resident
            pl.BlockSpec((1, N), lambda i: (0, 0)),          # gamma
            pl.BlockSpec((1, N), lambda i: (0, 0)),          # beta
        ],
        out_specs=pl.BlockSpec((tb, L, N), lambda i: (i, 0, 0)),
        compiler_params=pltpu.CompilerParams(
            dimension_semantics=("parallel",),               # batch axis
            vmem_limit_bytes=vmem_limit,
        ),
        cost_estimate=cost,
    )(batch_x, w0, gamma2, beta2)


def dishts_norm_ref(batch_x, reduce_mlayer, gamma, beta):
    """Pure-JAX reference mirroring the PyTorch forward (mode='norm')."""
    B, L, N = batch_x.shape
    x_t = jnp.transpose(batch_x.astype(jnp.float32), (2, 0, 1))  # (N, B, L)
    theta = jnp.einsum('nbl,nlj->nbj', x_t, reduce_mlayer)       # (N, B, 2)
    theta = jnp.transpose(theta, (1, 2, 0))                      # (B, 2, N)
    theta = _gelu_exact(theta)
    phil = theta[:, :1, :]                                       # (B, 1, N)
    xil = jnp.sum((batch_x - phil) ** 2, axis=1, keepdims=True) / (L - 1)
    temp = (batch_x - phil) / jnp.sqrt(xil + _EPS)
    return temp * gamma + beta


if __name__ == "__main__":
    B, L, N = 2, 8, 4  # batch, seq_len (lookback), n_series

    key = jax.random.PRNGKey(0)
    k_x, k_w = jax.random.split(key)

    batch_x = jax.random.normal(k_x, (B, L, N), dtype=jnp.float32)
    # init == 'standard': torch.rand(n_series, lookback, 2) / lookback
    reduce_mlayer = jax.random.uniform(k_w, (N, L, 2), dtype=jnp.float32) / L
    gamma = jnp.ones((N,), dtype=jnp.float32)
    beta = jnp.zeros((N,), dtype=jnp.float32)

    out = dishts_norm(batch_x, reduce_mlayer, gamma, beta)
    out = jax.block_until_ready(out)

    ref = dishts_norm_ref(batch_x, reduce_mlayer, gamma, beta)
    assert out.shape == (B, L, N)
    assert jnp.allclose(out, ref, atol=1e-5, rtol=1e-5), "mismatch vs reference"

    print("KERNEL_OK")
</pallas_src>

<mosaic_0001>
module attributes {stable_mosaic.version = 11 : i64} {
  func.func @dishts_norm_kernel(%arg0: i32, %arg1: memref<1x8x4xf32, #tpu.memory_space<vmem>>, %arg2: memref<8x4xf32, #tpu.memory_space<vmem>>, %arg3: memref<1x4xf32, #tpu.memory_space<vmem>>, %arg4: memref<1x4xf32, #tpu.memory_space<vmem>>, %arg5: memref<1x8x4xf32, #tpu.memory_space<vmem>>) attributes {dimension_semantics = [#tpu.dimension_semantics<parallel>], iteration_bounds = array<i64: 2>, scalar_prefetch = 0 : i64, scratch_operands = 0 : i64, tpu.core_type = #tpu.core_type<tc>, window_params = [{transform_indices = @transform_0, window_bounds = array<i64: 1, 8, 4>}, {pipeline_mode = #tpu.pipeline_mode<synchronous>, transform_indices = @transform_1, window_bounds = array<i64: 8, 4>}, {pipeline_mode = #tpu.pipeline_mode<synchronous>, transform_indices = @transform_2, window_bounds = array<i64: 1, 4>}, {pipeline_mode = #tpu.pipeline_mode<synchronous>, transform_indices = @transform_3, window_bounds = array<i64: 1, 4>}, {transform_indices = @transform_4, window_bounds = array<i64: 1, 8, 4>}]} {
    %c0 = arith.constant 0 : index
    %c0_0 = arith.constant 0 : index
    %c0_1 = arith.constant 0 : index
    %0 = vector.load %arg1[%c0, %c0_0, %c0_1] : memref<1x8x4xf32, #tpu.memory_space<vmem>>, vector<1x8x4xf32>
    %c0_2 = arith.constant 0 : index
    %c0_3 = arith.constant 0 : index
    %1 = vector.load %arg2[%c0_2, %c0_3] : memref<8x4xf32, #tpu.memory_space<vmem>>, vector<8x4xf32>
    %c0_4 = arith.constant 0 : index
    %c0_5 = arith.constant 0 : index
    %2 = vector.load %arg3[%c0_4, %c0_5] : memref<1x4xf32, #tpu.memory_space<vmem>>, vector<1x4xf32>
    %c0_6 = arith.constant 0 : index
    %c0_7 = arith.constant 0 : index
    %3 = vector.load %arg4[%c0_6, %c0_7] : memref<1x4xf32, #tpu.memory_space<vmem>>, vector<1x4xf32>
    %4 = vector.shape_cast %1 : vector<8x4xf32> to vector<1x8x4xf32>
    %5 = arith.mulf %0, %4 : vector<1x8x4xf32>
    %cst = arith.constant dense<0.000000e+00> : vector<1x4xf32>
    %6 = vector.multi_reduction <add>, %5, %cst [1] : vector<1x8x4xf32> to vector<1x4xf32>
    %7 = vector.shape_cast %6 : vector<1x4xf32> to vector<1x1x4xf32>
    %cst_8 = arith.constant 5.000000e-01 : f32
    %8 = vector.broadcast %cst_8 : f32 to vector<1x1x4xf32>
    %9 = arith.mulf %8, %7 : vector<1x1x4xf32>
    %cst_9 = arith.constant 0.707106769 : f32
    %10 = vector.broadcast %cst_9 : f32 to vector<1x1x4xf32>
    %11 = arith.mulf %7, %10 : vector<1x1x4xf32>
    %12 = math.erf %11 : vector<1x1x4xf32>
    %cst_10 = arith.constant 1.000000e+00 : f32
    %13 = vector.broadcast %cst_10 : f32 to vector<1x1x4xf32>
    %14 = arith.addf %13, %12 : vector<1x1x4xf32>
    %15 = arith.mulf %9, %14 : vector<1x1x4xf32>
    %16 = vector.broadcast %15 : vector<1x1x4xf32> to vector<1x8x4xf32>
    %17 = arith.subf %0, %16 : vector<1x8x4xf32>
    %18 = arith.mulf %17, %17 : vector<1x8x4xf32>
    %cst_11 = arith.constant dense<0.000000e+00> : vector<1x4xf32>
    %19 = vector.multi_reduction <add>, %18, %cst_11 [1] : vector<1x8x4xf32> to vector<1x4xf32>
    %20 = vector.shape_cast %19 : vector<1x4xf32> to vector<1x1x4xf32>
    %cst_12 = arith.constant 0.142857149 : f32
    %21 = vector.broadcast %cst_12 : f32 to vector<1x1x4xf32>
    %22 = arith.mulf %20, %21 : vector<1x1x4xf32>
    %23 = vector.shape_cast %2 : vector<1x4xf32> to vector<1x1x4xf32>
    %cst_13 = arith.constant 9.99999993E-9 : f32
    %24 = vector.broadcast %cst_13 : f32 to vector<1x1x4xf32>
    %25 = arith.addf %22, %24 : vector<1x1x4xf32>
    %26 = math.rsqrt %25 : vector<1x1x4xf32>
    %27 = arith.mulf %23, %26 : vector<1x1x4xf32>
    %28 = vector.broadcast %27 : vector<1x1x4xf32> to vector<1x8x4xf32>
    %29 = arith.mulf %17, %28 : vector<1x8x4xf32>
    %30 = vector.shape_cast %3 : vector<1x4xf32> to vector<1x1x4xf32>
    %31 = vector.broadcast %30 : vector<1x1x4xf32> to vector<1x8x4xf32>
    %32 = arith.addf %29, %31 : vector<1x8x4xf32>
    %c0_14 = arith.constant 0 : index
    %c0_15 = arith.constant 0 : index
    %c0_16 = arith.constant 0 : index
    %33 = vector.load %arg5[%c0_14, %c0_15, %c0_16] : memref<1x8x4xf32, #tpu.memory_space<vmem>>, vector<1x8x4xf32>
    tpu.vector_store %arg5[%c0_14, %c0_15, %c0_16], %32 {strides = array<i32>} : memref<1x8x4xf32, #tpu.memory_space<vmem>>, vector<1x8x4xf32>,
    return
  }
  func.func @transform_0(%arg0: i32) -> (i32, i32, i32) {
    %c0_i32 = arith.constant 0 : i32
    %c0_i32_0 = arith.constant 0 : i32
    %c0_i32_1 = arith.constant 0 : i32
    return %arg0, %c0_i32, %c0_i32_0 : i32, i32, i32
  }
  func.func @transform_1(%arg0: i32) -> (i32, i32) {
    %c0_i32 = arith.constant 0 : i32
    %c0_i32_0 = arith.constant 0 : i32
    %c0_i32_1 = arith.constant 0 : i32
    return %c0_i32, %c0_i32_0 : i32, i32
  }
  func.func @transform_2(%arg0: i32) -> (i32, i32) {
    %c0_i32 = arith.constant 0 : i32
    %c0_i32_0 = arith.constant 0 : i32
    %c0_i32_1 = arith.constant 0 : i32
    return %c0_i32, %c0_i32_0 : i32, i32
  }
  func.func @transform_3(%arg0: i32) -> (i32, i32) {
    %c0_i32 = arith.constant 0 : i32
    %c0_i32_0 = arith.constant 0 : i32
    %c0_i32_1 = arith.constant 0 : i32
    return %c0_i32, %c0_i32_0 : i32, i32
  }
  func.func @transform_4(%arg0: i32) -> (i32, i32, i32) {
    %c0_i32 = arith.constant 0 : i32
    %c0_i32_0 = arith.constant 0 : i32
    %c0_i32_1 = arith.constant 0 : i32
    return %arg0, %c0_i32, %c0_i32_0 : i32, i32, i32
  }
}

</mosaic_0001>

<llo_original>
// kernel: tpu_custom_call.1
$region0: #{tpu_custom_call.1}
  #allocation0 [shape = 'u32[]', space=smem, size = 0x4, offset = 0x4, fixed_abs, tag = 'smem constant byte address 0x4 - core index']
  #allocation1 [shape = 'u32[72,128]{1,0:T(1,128)}', space=vmem, size = 0x9000, scoped, tag = 'internal scratch']
  %s0 = inlined_call_operand.vmem [shape: f32[2,8,4], index: 0, kind: input, shape index: {}]
  %s1 = inlined_call_operand.vmem [shape: f32[8,4], index: 1, kind: input, shape index: {}]
  %s2 = inlined_call_operand.vmem [shape: f32[1,4], index: 2, kind: input, shape index: {}]
  %s3 = inlined_call_operand.vmem [shape: f32[1,4], index: 3, kind: input, shape index: {}]
  %s4 = inlined_call_operand.vmem [shape: f32[2,8,4], index: 4, kind: output, shape index: {}]
  %s5 = sld [smem:[#allocation0]]
  $region49: #{tpu_custom_call.1} parent=0
    _
  %s7 = ssub.s32 1, %s5
  %s8 = scalar_select 0, %s7, %s5
  loop: start=0, step=1, limit=4
  $region2: #{tpu_custom_call.1} parent=0 // loop_pre_header
    _
  $region3: #{tpu_custom_call.1} parent=0 // loop_header
    %s10 = sphi 0, %s14
    %p11 = scmp.ge.s32.totalorder %s10, 4
    %s20 = sphi 0, %s22
    %s23 = sphi 0, %s20
    %s24 = sphi 0, %s23
    %s40 = sphi 0, %s24
    %s44 = sphi 0, %s44
    %s46 = sphi 0, %s44
    %s47 = sphi 0, %s46
    %s61 = sphi 0, %s47
    %s65 = sphi 0, %s65
    %s67 = sphi 0, %s65
    %s68 = sphi 0, %s67
    %s82 = sphi 0, %s68
    %s86 = sphi 0, %s86
    %s88 = sphi 0, %s86
    %s89 = sphi 0, %s88
    %s103 = sphi 0, %s89
    %s109 = sphi 0, %s111
    %s112 = sphi 0, %s109
    %s113 = sphi 0, %s112
    %s129 = sphi 0, %s113
  $region4: #{tpu_custom_call.1} parent=0 // loop_header_branch
    %13 = sbr.rel (%p11) target = $region8
  $region5: #{tpu_custom_call.1} parent=0 // loop_body
    %s15 = ssub.s32 %s10, 1
    %s16 = ssub.s32 %s10, 2
    %s17 = sadd.s32 %s10, 1
    %s18 = ssub.s32 %s10, %s17
    %p19 = scmp.eq.s32.totalorder %s18, 0
    %s21 = sadd.s32 %s20, 1
    %s22 = scalar_select %p19, %s20, %s21
    %p25 = pneg %p19
    %p26 = scmp.eq.s32.totalorder %s10, 1
    %p27 = por %p25, %p26
    %p28 = scmp.ne.s32.totalorder %s20, %s23
    %p29 = scmp.eq.s32.totalorder %s10, 0
    %p30 = por %p28, %p29
    %p31 = scmp.ne.s32.totalorder %s20, %s23
    %p32 = scmp.eq.s32.totalorder %s15, 1
    %p33 = por %p31, %p32
    %p34 = scmp.ne.s32.totalorder %s23, %s24
    %p35 = scmp.eq.s32.totalorder %s15, 0
    %p36 = por %p34, %p35
    %p37 = scmp.ne.s32.totalorder %s23, %s24
    %p38 = scmp.eq.s32.totalorder %s16, 1
    %p39 = por %p37, %p38
    %p41 = scmp.ne.s32.totalorder %s24, %s40
    %p42 = scmp.eq.s32.totalorder %s16, 0
    %p43 = por %p41, %p42
    %s45 = sadd.s32 %s44, 1
    %p48 = scmp.eq.s32.totalorder %s10, 1
    %p49 = scmp.ne.s32.totalorder %s44, %s46
    %p50 = scmp.eq.s32.totalorder %s10, 0
    %p51 = por %p49, %p50
    %p52 = scmp.ne.s32.totalorder %s44, %s46
    %p53 = scmp.eq.s32.totalorder %s15, 1
    %p54 = por %p52, %p53
    %p55 = scmp.ne.s32.totalorder %s46, %s47
    %p56 = scmp.eq.s32.totalorder %s15, 0
    %p57 = por %p55, %p56
    %p58 = scmp.ne.s32.totalorder %s46, %s47
    %p59 = scmp.eq.s32.totalorder %s16, 1
    %p60 = por %p58, %p59
    %p62 = scmp.ne.s32.totalorder %s47, %s61
    %p63 = scmp.eq.s32.totalorder %s16, 0
    %p64 = por %p62, %p63
    %s66 = sadd.s32 %s65, 1
    %p69 = scmp.eq.s32.totalorder %s10, 1
    %p70 = scmp.ne.s32.totalorder %s65, %s67
    %p71 = scmp.eq.s32.totalorder %s10, 0
    %p72 = por %p70, %p71
    %p73 = scmp.ne.s32.totalorder %s65, %s67
    %p74 = scmp.eq.s32.totalorder %s15, 1
    %p75 = por %p73, %p74
    %p76 = scmp.ne.s32.totalorder %s67, %s68
    %p77 = scmp.eq.s32.totalorder %s15, 0
    %p78 = por %p76, %p77
    %p79 = scmp.ne.s32.totalorder %s67, %s68
    %p80 = scmp.eq.s32.totalorder %s16, 1
    %p81 = por %p79, %p80
    %p83 = scmp.ne.s32.totalorder %s68, %s82
    %p84 = scmp.eq.s32.totalorder %s16, 0
    %p85 = por %p83, %p84
    %s87 = sadd.s32 %s86, 1
    %p90 = scmp.eq.s32.totalorder %s10, 1
    %p91 = scmp.ne.s32.totalorder %s86, %s88
    %p92 = scmp.eq.s32.totalorder %s10, 0
    %p93 = por %p91, %p92
    %p94 = scmp.ne.s32.totalorder %s86, %s88
    %p95 = scmp.eq.s32.totalorder %s15, 1
    %p96 = por %p94, %p95
    %p97 = scmp.ne.s32.totalorder %s88, %s89
    %p98 = scmp.eq.s32.totalorder %s15, 0
    %p99 = por %p97, %p98
    %p100 = scmp.ne.s32.totalorder %s88, %s89
    %p101 = scmp.eq.s32.totalorder %s16, 1
    %p102 = por %p100, %p101
    %p104 = scmp.ne.s32.totalorder %s89, %s103
    %p105 = scmp.eq.s32.totalorder %s16, 0
    %p106 = por %p104, %p105
    %s107 = ssub.s32 %s10, %s17
    %p108 = scmp.eq.s32.totalorder %s107, 0
    %s110 = sadd.s32 %s109, 1
    %s111 = scalar_select %p108, %s109, %s110
    %p114 = pneg %p108
    %p115 = scmp.eq.s32.totalorder %s10, 1
    %p116 = por %p114, %p115
    %p117 = scmp.ne.s32.totalorder %s109, %s112
    %p118 = scmp.eq.s32.totalorder %s10, 0
    %p119 = por %p117, %p118
    %p120 = scmp.ne.s32.totalorder %s109, %s112
    %p121 = scmp.eq.s32.totalorder %s15, 1
    %p122 = por %p120, %p121
    %p123 = scmp.ne.s32.totalorder %s112, %s113
    %p124 = scmp.eq.s32.totalorder %s15, 0
    %p125 = por %p123, %p124
    %p126 = scmp.ne.s32.totalorder %s112, %s113
    %p127 = scmp.eq.s32.totalorder %s16, 1
    %p128 = por %p126, %p127
    %p130 = scmp.ne.s32.totalorder %s113, %s129
    %p131 = scmp.eq.s32.totalorder %s16, 0
    %p132 = por %p130, %p131
    %p133 = scmp.le.s32.totalorder 1, %s10
    %p134 = scmp.lt.s32.totalorder %s10, 3
    %p135 = pnand %p133, %p134
    %p136 = pneg %p135
    // Predicated region
    $region9: #{tpu_custom_call.1} parent=5 // pred_check
      _
    $region10: #{tpu_custom_call.1} parent=5 // pred_check_branch
      %138 = sbr.rel (%p135) target = $region12
    $region11: #{tpu_custom_call.1} parent=5 // pred_region
      %s139 = ssub.s32 %s10, 1
      // Predicated region
      $region13: #{tpu_custom_call.1} parent=11 // pred_check
        %p140 = pneg %p57
      $region14: #{tpu_custom_call.1} parent=11 // pred_check_branch
        %142 = sbr.rel (%p140) target = $region16
      $region15: #{tpu_custom_call.1} parent=11 // pred_region
        _
      $region16: #{tpu_custom_call.1} parent=11 // pred_fallthru
        _
      // Predicated region
      $region17: #{tpu_custom_call.1} parent=11 // pred_check
        %p143 = pneg %p78
      $region18: #{tpu_custom_call.1} parent=11 // pred_check_branch
        %145 = sbr.rel (%p143) target = $region20
      $region19: #{tpu_custom_call.1} parent=11 // pred_region
        _
      $region20: #{tpu_custom_call.1} parent=11 // pred_fallthru
        _
      // Predicated region
      $region21: #{tpu_custom_call.1} parent=11 // pred_check
        %p146 = pneg %p99
      $region22: #{tpu_custom_call.1} parent=11 // pred_check_branch
        %148 = sbr.rel (%p146) target = $region24
      $region23: #{tpu_custom_call.1} parent=11 // pred_region
        _
      $region24: #{tpu_custom_call.1} parent=11 // pred_fallthru
        _
    $region12: #{tpu_custom_call.1} parent=5 // pred_fallthru
      _
    %p149 = scmp.lt.s32.totalorder %s10, 2
    // Predicated region
    $region25: #{tpu_custom_call.1} parent=5 // pred_check
      %p150 = pneg %p149
    $region26: #{tpu_custom_call.1} parent=5 // pred_check_branch
      %152 = sbr.rel (%p150) target = $region28
    $region27: #{tpu_custom_call.1} parent=5 // pred_region
      // Predicated region
      $region29: #{tpu_custom_call.1} parent=27 // pred_check
        %p153 = pneg %p30
      $region30: #{tpu_custom_call.1} parent=27 // pred_check_branch
        %155 = sbr.rel (%p153) target = $region32
      $region31: #{tpu_custom_call.1} parent=27 // pred_region
        %p156 = scmp.lt.s32.totalorder %s10, 1
        %s157 = scalar_select %p156, %s10, 1
        %s158 = smul.addr %s157, 8
        %s159 = scalar_lea.vmem %s0, %s158
      $region32: #{tpu_custom_call.1} parent=27 // pred_fallthru
        _
    $region28: #{tpu_custom_call.1} parent=5 // pred_fallthru
      _
    %p160 = scmp.le.s32.totalorder 1, %s10
    %p161 = scmp.lt.s32.totalorder %s10, 3
    %p162 = pnand %p160, %p161
    %p163 = pneg %p162
    // Predicated region
    $region33: #{tpu_custom_call.1} parent=5 // pred_check
      _
    $region34: #{tpu_custom_call.1} parent=5 // pred_check_branch
      %165 = sbr.rel (%p162) target = $region36
    $region35: #{tpu_custom_call.1} parent=5 // pred_region
      %s166 = ssub.s32 %s10, 1
      %p167 = scmp.lt.s32.totalorder %s15, 1
      %s168 = scalar_select %p167, %s15, 1
      %s169 = smul.addr %s168, 8
      %s170 = scalar_lea.vmem %s0, %s169
      %p171 = pneg %p36
      %p172 = pneg %p33
      %p173 = pneg %p57
      %p174 = pneg %p54
      %p175 = pneg %p78
      %p176 = pneg %p75
      %p177 = pneg %p99
      %p178 = pneg %p96
      %p179 = pneg %p125
      %p180 = pneg %p122
      %p181 = scmp.lt.s32.totalorder %s15, 1
      %s182 = scalar_select %p181, %s15, 1
      %s183 = smul.addr %s182, 8
      %s184 = scalar_lea.vmem %s4, %s183
      %p185 = scmp.lt.s32.totalorder %s15, 1
      %s186 = scalar_select %p185, %s15, 1
      %s187 = smul.addr %s186, 8
      %s188 = scalar_lea.vmem %s0, %s187
      %p189 = scmp.lt.s32.totalorder %s15, 1
      %s190 = scalar_select %p189, %s15, 1
      %s191 = smul.addr %s190, 8
      %s192 = scalar_lea.vmem %s4, %s191
      %v193 = vld [vmem:[%s188] sm:$0xff]
      %v194 = vld [vmem:[%s1] sm:$0xff]
      %v195 = vld [vmem:[%s2] sm:$0x1]
      %v196 = vld [vmem:[%s3] sm:$0x1]
      %v197 = vmul.f32 %v193, %v194
      %vm198 = vcmask 31744
      %v199 = vsel %vm198, %v197, 0.0
      %v200 = vrot.slane %v199, 4
      %v201 = vadd.f32 %v199, %v200
      %v202 = vrot.slane %v201, 2
      %v203 = vadd.f32 %v201, %v202
      %v204 = vrot.slane %v203, 1
      %v205 = vadd.f32 %v203, %v204
      %v206 = vmul.f32 %v205, 0.5
      %v207 = vmul.f32 %v205, 0.70710677
      %v208 = vmul.f32 %v207, %v207
      %v209 = vmin.f32 16.0, %v208
      %v210 = vmul.f32 %v209, 2.1237322e-06
      %v211 = vadd.f32 %v210, 0.00028619796
      %v212 = vmul.f32 %v209, %v211
      %v213 = vadd.f32 %v212, 0.0036580483
      %v214 = vmul.f32 %v209, %v213
      %v215 = vadd.f32 %v214, 0.05243302
      %v216 = vmul.f32 %v209, %v215
      %v217 = vadd.f32 %v216, 0.18741608
      %v218 = vmul.f32 %v209, %v217
      %v219 = vadd.f32 %v218, 1.1283791
      %v220 = vmul.f32 %v207, %v219
      %v221 = vmul.f32 %v209, 3.8918573e-05
      %v222 = vadd.f32 %v221, 0.001143296
      %v223 = vmul.f32 %v209, %v222
      %v224 = vadd.f32 %v223, 0.014752088
      %v225 = vmul.f32 %v209, %v224
      %v226 = vadd.f32 %v225, 0.112945676
      %v227 = vmul.f32 %v209, %v226
      %v228 = vadd.f32 %v227, 0.4994258
      %v229 = vmul.f32 %v209, %v228
      %v230 = vadd.f32 %v229, 1.0
      %v231 = vrcp.pop %v230
      %v232 = vmul.f32 %v230, %v231
      %v233 = vsub.f32 1.0, %v232
      %v234 = vmul.f32 %v231, %v233
      %v235 = vadd.f32 %v231, %v234
      %vm236 = vweird.f32 %v230
      %vm237 = vweird.f32 %v231
      %vm238 = vmor %vm236, %vm237
      %v239 = vsel %vm238, %v231, %v235
      %v240 = vand.u32 2147483647, %v230
      %vm241 = vcmp.eq.f32.partialorder %v240, 8.507059e+37
      %v242 = vand.u32 %v230, 2147483648
      %v243 = vor.u32 1.1754944e-38, %v242
      %v244 = vsel %vm241, %v243, %v239
      %v245 = vmul.f32 %v220, %v244
      %v246 = vmin.f32 %v245, 1.0
      %v247 = vmax.f32 %v246, -1.0
      %v248 = vadd.f32 %v247, 1.0
      %v249 = vmul.f32 %v206, %v248
      %v250 = vsub.f32 %v193, %v249
      %v251 = vmul.f32 %v250, %v250
      %v252 = vsel %vm198, %v251, 0.0
      %v253 = vrot.slane %v252, 4
      %v254 = vadd.f32 %v252, %v253
      %v255 = vrot.slane %v254, 2
      %v256 = vadd.f32 %v254, %v255
      %v257 = vrot.slane %v256, 1
      %v258 = vadd.f32 %v256, %v257
      %v259 = vmul.f32 %v258, 0.14285715
      %v260 = vadd.f32 %v259, 1e-08
      %v261 = vrsqrt.pop %v260
      %v262 = vmul.f32 %v261, %v260
      %v263 = vmul.f32 %v262, %v261
      %v264 = vmul.f32 0.5, %v263
      %v265 = vsub.f32 1.5, %v264
      %v266 = vmul.f32 %v261, %v265
      %vm267 = vweird.f32 %v260
      %vm268 = vweird.f32 %v261
      %vm269 = vmor %vm267, %vm268
      %v270 = vsel %vm269, %v261, %v266
      %v271 = vmul.f32 %v195, %v270
      %v273 = vperm.slane %v271, 0
      %v275 = vmul.f32 %v250, %v273
      %v277 = vperm.slane %v196, 0
      %v279 = vadd.f32 %v275, %v277
      %280 = vst.msk [vmem:[%s192] sm:$0xff] %vm198, %v279
      %p281 = scmp.lt.s32.totalorder %s15, 1
      %s282 = scalar_select %p281, %s15, 1
      %s283 = smul.addr %s282, 8
      %s284 = scalar_lea.vmem %s4, %s283
      // Predicated region
      $region37: #{tpu_custom_call.1} parent=35 // pred_check
        %p285 = pneg %p122
      $region38: #{tpu_custom_call.1} parent=35 // pred_check_branch
        %287 = sbr.rel (%p285) target = $region40
      $region39: #{tpu_custom_call.1} parent=35 // pred_region
        _
      $region40: #{tpu_custom_call.1} parent=35 // pred_fallthru
        _
    $region36: #{tpu_custom_call.1} parent=5 // pred_fallthru
      _
    %p288 = scmp.le.s32.totalorder 2, %s10
    // Predicated region
    $region41: #{tpu_custom_call.1} parent=5 // pred_check
      %p289 = pneg %p288
    $region42: #{tpu_custom_call.1} parent=5 // pred_check_branch
      %291 = sbr.rel (%p289) target = $region44
    $region43: #{tpu_custom_call.1} parent=5 // pred_region
      %s292 = ssub.s32 %s10, 2
      // Predicated region
      $region45: #{tpu_custom_call.1} parent=43 // pred_check
        %p293 = pneg %p128
      $region46: #{tpu_custom_call.1} parent=43 // pred_check_branch
        %295 = sbr.rel (%p293) target = $region48
      $region47: #{tpu_custom_call.1} parent=43 // pred_region
        %p296 = scmp.lt.s32.totalorder %s16, 1
        %s297 = scalar_select %p296, %s16, 1
        %s298 = smul.addr %s297, 8
        %s299 = scalar_lea.vmem %s4, %s298
      $region48: #{tpu_custom_call.1} parent=43 // pred_fallthru
        _
    $region44: #{tpu_custom_call.1} parent=5 // pred_fallthru
      _
  $region6: #{tpu_custom_call.1} parent=0 // loop_footer
    %s14 = sadd.s32 1, %s10
  $region7: #{tpu_custom_call.1} parent=0 // loop_footer_branch
    %9 = sbr.rel target = $region3
  $region8: #{tpu_custom_call.1} parent=0 // loop_exit
    _

</llo_original>
